<compile_context>
chip_gen: v7x
topology: tpu7x:2x2x1
jax: 0.10.0
libtpu: 0.0.40
codegen_flags: <defaults>
</compile_context>

<pallas_src>
import math

import jax
import jax.numpy as jnp
from jax.experimental import pallas as pl
from jax.experimental.pallas import tpu as pltpu


def _decoder_kernel(tsum_ref, xsum_ref, h_ref, c_ref, ymid_ref):
    # Per-grid-step block shapes (grid = (batch, n_tiles)):
    #   tsum_ref: (1, tile_n, 1)   xsum_ref: (1, 1, m)
    #   h_ref:    (1, tile_n, h_dim)
    #   c_ref:    (1, h_dim)       -- c = -0.5 * exp(-2 * sigma)
    #   ymid_ref: (1, m, h_dim)    -- resident across the n-reduction axis
    k = pl.program_id(1)

    @pl.when(k == 0)
    def _():
        ymid_ref[...] = jnp.zeros_like(ymid_ref)

    t_sum = tsum_ref[0]                    # (tile_n, 1)  sum_d t[n, d]
    x_sum = xsum_ref[0]                    # (1, m)       sum_d x[m, d]
    h = h_ref[0]                           # (tile_n, h_dim)
    c = c_ref[0]                           # (h_dim,)

    # diff[n, m] = sum_d (x[m, d] - t[n, d])
    diff = x_sum - t_sum                   # (tile_n, m)  broadcast, no cube
    d2 = diff * diff                       # (tile_n, m)

    # weight[n, m, ch] = exp(-0.5 * (diff[n, m] / exp(sigma[ch]))**2)
    #                  = exp(d2[n, m] * c[ch])
    w = jnp.exp(d2[:, :, None] * c[None, None, :])       # (tile_n, m, h_dim)

    # y_mid[m, ch] += sum_n h[n, ch] * weight[n, m, ch]
    ymid_ref[0] = ymid_ref[0] + jnp.sum(h[:, None, :] * w, axis=0)


def _pick_tile_n(n, m, h_dim, cube_budget_bytes):
    """Largest multiple-of-8 n-tile whose f32 cube fits the budget and divides n."""
    per_row = max(1, m * h_dim * 4)
    tile = max(8, (cube_budget_bytes // per_row) // 8 * 8)
    tile = min(tile, n)
    if n % 8 != 0:
        return n                     # tiny / ragged n: process in one shot
    while n % tile != 0:
        tile -= 8
    return max(tile, 8)


def decoder_forward(t, h, x, sigma, fc_weight, fc_bias, *, tile_n=None):
    """Pallas implementation of Decoder.forward.

    Args:
      t:  (b, n, x_dim) float32 uniform grid
      h:  (b, n, h_dim) float32 latent
      x:  (b, m, x_dim) float32 targets
      sigma: (h_dim,) float32 log length-scale parameter
      fc_weight: (y_dim, h_dim) float32 (PyTorch Linear layout)
      fc_bias:   (y_dim,) float32
    Returns:
      (b, m, y_dim) float32
    """
    b, n, _ = t.shape
    _, m, _ = x.shape
    h_dim = h.shape[-1]

    # --- wrapper-side precompute (cheap, parameter/row-sum folding) ---
    t_sum = jnp.sum(t, axis=-1).reshape(b, n, 1)          # (b, n, 1)
    x_sum = jnp.sum(x, axis=-1).reshape(b, 1, m)          # (b, 1, m)
    c = (-0.5 * jnp.exp(-2.0 * sigma)).reshape(1, h_dim)  # (1, h_dim)

    if tile_n is None:
        # ~4 MiB f32 cube per step: comfortable under the 16/32/32 MiB scoped
        # VMEM defaults of v5e/v6e/v7x even with double-buffered inputs.
        tile_n = _pick_tile_n(n, m, h_dim, 4 * 1024 * 1024)
    num_k = n // tile_n if n % tile_n == 0 else 1
    if n % tile_n != 0:
        tile_n = n

    grid_spec = pltpu.PrefetchScalarGridSpec(
        num_scalar_prefetch=0,
        grid=(b, num_k),
        in_specs=[
            pl.BlockSpec((1, tile_n, 1), lambda i, k: (i, k, 0)),      # t_sum
            pl.BlockSpec((1, 1, m), lambda i, k: (i, 0, 0)),           # x_sum
            pl.BlockSpec((1, tile_n, h_dim), lambda i, k: (i, k, 0)),  # h
            pl.BlockSpec((1, h_dim), lambda i, k: (0, 0)),             # c
        ],
        out_specs=pl.BlockSpec((1, m, h_dim), lambda i, k: (i, 0, 0)),
    )

    y_mid = pl.pallas_call(
        _decoder_kernel,
        out_shape=jax.ShapeDtypeStruct((b, m, h_dim), jnp.float32),
        grid_spec=grid_spec,
        compiler_params=pltpu.CompilerParams(
            dimension_semantics=("parallel", "arbitrary"),
            vmem_limit_bytes=32 * 1024 * 1024,
        ),
    )(t_sum, x_sum, h, c)

    # Tiny Linear (y_dim lanes << 128): keep it in XLA so the kernel output
    # stays lane-dense instead of emitting masked 4-lane stores.
    return y_mid @ fc_weight.T + fc_bias


def decoder_reference(t, h, x, sigma, fc_weight, fc_bias):
    """Pure-JAX reference mirroring the PyTorch module exactly."""
    diff = jnp.sum(x[:, None, :, :] - t[:, :, None, :], axis=-1)[..., None]   # (b,n,m,1)
    scale = jnp.exp(sigma).reshape(1, 1, 1, -1)
    weight = jnp.exp(-0.5 * (diff / scale) ** 2)                               # (b,n,m,c)
    y_out = jnp.sum(h[:, :, None, :] * weight, axis=1)                         # (b,m,c)
    return y_out @ fc_weight.T + fc_bias


if __name__ == "__main__":
    # Small shapes consistent with the module's forward signature.
    b, n, m = 2, 16, 8
    x_dim, h_dim, y_dim = 2, 32, 4
    length_scale = 0.5

    key = jax.random.PRNGKey(0)
    k_t, k_h, k_x, k_w, k_b = jax.random.split(key, 5)

    t = jax.random.uniform(k_t, (b, n, x_dim), dtype=jnp.float32)
    h = jax.random.normal(k_h, (b, n, h_dim), dtype=jnp.float32)
    x = jax.random.uniform(k_x, (b, m, x_dim), dtype=jnp.float32)

    # Deterministic parameter init (matches shapes in Decoder.__init__).
    sigma = jnp.full((h_dim,), math.log(length_scale), dtype=jnp.float32)
    fc_weight = jax.random.normal(k_w, (y_dim, h_dim), dtype=jnp.float32) / math.sqrt(h_dim)
    fc_bias = jax.random.normal(k_b, (y_dim,), dtype=jnp.float32) * 0.01

    out = decoder_forward(t, h, x, sigma, fc_weight, fc_bias)
    out = jax.block_until_ready(out)

    ref = decoder_reference(t, h, x, sigma, fc_weight, fc_bias)
    assert out.shape == (b, m, y_dim), out.shape
    assert jnp.allclose(out, ref, atol=1e-5, rtol=1e-5), float(jnp.max(jnp.abs(out - ref)))

    print("KERNEL_OK")
</pallas_src>

<mosaic_0001>
module attributes {stable_mosaic.version = 11 : i64} {
  func.func @_decoder_kernel(%arg0: i32, %arg1: i32, %arg2: memref<1x16x1xf32, #tpu.memory_space<vmem>>, %arg3: memref<1x1x8xf32, #tpu.memory_space<vmem>>, %arg4: memref<1x16x32xf32, #tpu.memory_space<vmem>>, %arg5: memref<1x32xf32, #tpu.memory_space<vmem>>, %arg6: memref<1x8x32xf32, #tpu.memory_space<vmem>>) attributes {dimension_semantics = [#tpu.dimension_semantics<parallel>, #tpu.dimension_semantics<arbitrary>], iteration_bounds = array<i64: 2, 1>, scalar_prefetch = 0 : i64, scratch_operands = 0 : i64, tpu.core_type = #tpu.core_type<tc>, window_params = [{transform_indices = @transform_0, window_bounds = array<i64: 1, 16, 1>}, {transform_indices = @transform_1, window_bounds = array<i64: 1, 1, 8>}, {transform_indices = @transform_2, window_bounds = array<i64: 1, 16, 32>}, {pipeline_mode = #tpu.pipeline_mode<synchronous>, transform_indices = @transform_3, window_bounds = array<i64: 1, 32>}, {transform_indices = @transform_4, window_bounds = array<i64: 1, 8, 32>}]} {
    %c0_i32 = arith.constant 0 : i32
    %0 = arith.cmpi eq, %arg1, %c0_i32 : i32
    %1 = arith.extui %0 : i1 to i32
    %c0_i32_0 = arith.constant 0 : i32
    %2 = arith.cmpi ne, %1, %c0_i32_0 : i32
    scf.if %2 {
      %cst_17 = arith.constant 0.000000e+00 : f32
      %31 = vector.broadcast %cst_17 : f32 to vector<1x8x32xf32>
      %c0_18 = arith.constant 0 : index
      %c0_19 = arith.constant 0 : index
      %c0_20 = arith.constant 0 : index
      %32 = vector.load %arg6[%c0_18, %c0_19, %c0_20] : memref<1x8x32xf32, #tpu.memory_space<vmem>>, vector<1x8x32xf32>
      tpu.vector_store %arg6[%c0_18, %c0_19, %c0_20], %31 {strides = array<i32>} : memref<1x8x32xf32, #tpu.memory_space<vmem>>, vector<1x8x32xf32>,
    } else {
    }
    %c0 = arith.constant 0 : index
    %c0_1 = arith.constant 0 : index
    %c0_2 = arith.constant 0 : index
    %3 = vector.load %arg2[%c0, %c0_1, %c0_2] : memref<1x16x1xf32, #tpu.memory_space<vmem>>, vector<1x16x1xf32>
    %4 = vector.shape_cast %3 : vector<1x16x1xf32> to vector<16x1xf32>
    %c0_3 = arith.constant 0 : index
    %c0_4 = arith.constant 0 : index
    %c0_5 = arith.constant 0 : index
    %5 = vector.load %arg3[%c0_3, %c0_4, %c0_5] : memref<1x1x8xf32, #tpu.memory_space<vmem>>, vector<1x1x8xf32>
    %6 = vector.shape_cast %5 : vector<1x1x8xf32> to vector<1x8xf32>
    %c0_6 = arith.constant 0 : index
    %c0_7 = arith.constant 0 : index
    %c0_8 = arith.constant 0 : index
    %7 = vector.load %arg4[%c0_6, %c0_7, %c0_8] : memref<1x16x32xf32, #tpu.memory_space<vmem>>, vector<1x16x32xf32>
    %8 = vector.shape_cast %7 : vector<1x16x32xf32> to vector<16x32xf32>
    %c0_9 = arith.constant 0 : index
    %c0_10 = arith.constant 0 : index
    %9 = vector.load %arg5[%c0_9, %c0_10] : memref<1x32xf32, #tpu.memory_space<vmem>>, vector<1x32xf32>
    %10 = vector.shape_cast %9 : vector<1x32xf32> to vector<32xf32>
    %11 = vector.broadcast %6 : vector<1x8xf32> to vector<16x8xf32>
    %12 = vector.broadcast %4 : vector<16x1xf32> to vector<16x8xf32>
    %13 = arith.subf %11, %12 : vector<16x8xf32>
    %14 = arith.mulf %13, %13 : vector<16x8xf32>
    %15 = vector.shape_cast %14 : vector<16x8xf32> to vector<16x8x1xf32>
    %16 = vector.shape_cast %10 : vector<32xf32> to vector<1x1x32xf32>
    %17 = vector.broadcast %15 : vector<16x8x1xf32> to vector<16x8x32xf32>
    %18 = vector.broadcast %16 : vector<1x1x32xf32> to vector<16x8x32xf32>
    %19 = arith.mulf %17, %18 : vector<16x8x32xf32>
    %20 = math.exp %19 : vector<16x8x32xf32>
    %c0_11 = arith.constant 0 : index
    %c0_12 = arith.constant 0 : index
    %c0_13 = arith.constant 0 : index
    %21 = vector.load %arg6[%c0_11, %c0_12, %c0_13] : memref<1x8x32xf32, #tpu.memory_space<vmem>>, vector<1x8x32xf32>
    %22 = vector.shape_cast %21 : vector<1x8x32xf32> to vector<8x32xf32>
    %23 = vector.shape_cast %8 : vector<16x32xf32> to vector<16x1x32xf32>
    %24 = vector.broadcast %23 : vector<16x1x32xf32> to vector<16x8x32xf32>
    %25 = arith.mulf %24, %20 : vector<16x8x32xf32>
    %cst = arith.constant dense<0.000000e+00> : vector<8x32xf32>
    %26 = vector.multi_reduction <add>, %25, %cst [0] : vector<16x8x32xf32> to vector<8x32xf32>
    %27 = arith.addf %22, %26 : vector<8x32xf32>
    %c0_14 = arith.constant 0 : index
    %c0_15 = arith.constant 0 : index
    %c0_16 = arith.constant 0 : index
    %28 = vector.load %arg6[%c0_14, %c0_15, %c0_16] : memref<1x8x32xf32, #tpu.memory_space<vmem>>, vector<1x8x32xf32>
    %29 = vector.shape_cast %28 : vector<1x8x32xf32> to vector<8x32xf32>
    %30 = vector.shape_cast %27 : vector<8x32xf32> to vector<1x8x32xf32>
    tpu.vector_store %arg6[%c0_14, %c0_15, %c0_16], %30 {strides = array<i32>} : memref<1x8x32xf32, #tpu.memory_space<vmem>>, vector<1x8x32xf32>,
    return
  }
  func.func @transform_0(%arg0: i32, %arg1: i32) -> (i32, i32, i32) {
    %c0_i32 = arith.constant 0 : i32
    %c0_i32_0 = arith.constant 0 : i32
    return %arg0, %arg1, %c0_i32 : i32, i32, i32
  }
  func.func @transform_1(%arg0: i32, %arg1: i32) -> (i32, i32, i32) {
    %c0_i32 = arith.constant 0 : i32
    %c0_i32_0 = arith.constant 0 : i32
    %c0_i32_1 = arith.constant 0 : i32
    return %arg0, %c0_i32, %c0_i32_0 : i32, i32, i32
  }
  func.func @transform_2(%arg0: i32, %arg1: i32) -> (i32, i32, i32) {
    %c0_i32 = arith.constant 0 : i32
    %c0_i32_0 = arith.constant 0 : i32
    return %arg0, %arg1, %c0_i32 : i32, i32, i32
  }
  func.func @transform_3(%arg0: i32, %arg1: i32) -> (i32, i32) {
    %c0_i32 = arith.constant 0 : i32
    %c0_i32_0 = arith.constant 0 : i32
    %c0_i32_1 = arith.constant 0 : i32
    return %c0_i32, %c0_i32_0 : i32, i32
  }
  func.func @transform_4(%arg0: i32, %arg1: i32) -> (i32, i32, i32) {
    %c0_i32 = arith.constant 0 : i32
    %c0_i32_0 = arith.constant 0 : i32
    %c0_i32_1 = arith.constant 0 : i32
    return %arg0, %c0_i32, %c0_i32_0 : i32, i32, i32
  }
}

</mosaic_0001>

<llo_original>
// kernel: tpu_custom_call.1
$region0: #{tpu_custom_call.1}
  #allocation0 [shape = 'u32[]', space=smem, size = 0x4, offset = 0x4, fixed_abs, tag = 'smem constant byte address 0x4 - core index']
  #allocation1 [shape = 'u32[144,128]{1,0:T(1,128)}', space=vmem, size = 0x12000, scoped, tag = 'internal scratch']
  %s0 = inlined_call_operand.vmem [shape: f32[2,16,1], index: 0, kind: input, shape index: {}]
  %s1 = inlined_call_operand.vmem [shape: f32[2,1,8], index: 1, kind: input, shape index: {}]
  %s2 = inlined_call_operand.vmem [shape: f32[2,16,32], index: 2, kind: input, shape index: {}]
  %s3 = inlined_call_operand.vmem [shape: f32[1,32], index: 3, kind: input, shape index: {}]
  %s4 = inlined_call_operand.hbm [shape: f32[2,8,32], index: 4, kind: output, shape index: {}]
  %s5 = sld [smem:[#allocation0]]
  $region53: #{tpu_custom_call.1} parent=0
    _
  %s7 = ssub.s32 1, %s5
  %s8 = scalar_select 0, %s7, %s5
  $region1: #{tpu_custom_call.1} parent=0
    #allocation2 [shape = 'u8[8192]{0}', space=vmem, size = 0x2000, scoped, tag = 'output window, operand 0']
    #allocation3 [shape = 's32[2]{0}', space=sflag, size = 0x8, scoped, tag = 'scoped memory for tpu_custom_call.1']
    %9 = vsyncpa [#allocation3], 0
    %s10 = scalar_lea.sflag [#allocation3], 1
    %11 = vsyncpa %s10, 0
    loop: start=0, step=1, limit=4
    $region2: #{tpu_custom_call.1} parent=1 // loop_pre_header
      _
    $region3: #{tpu_custom_call.1} parent=1 // loop_header
      %s13 = sphi 0, %s17
      %p14 = scmp.ge.s32.totalorder %s13, 4
      %s20 = sphi 0, %s32
      %s21 = sphi 0, %s28
      %s22 = sphi 0, %s20
      %s23 = sphi 0, %s21
      %s24 = sphi 0, %s22
      %s25 = sphi 0, %s23
      %s37 = sphi 0, %s39
      %s40 = sphi 0, %s37
      %s41 = sphi 0, %s40
      %s57 = sphi 0, %s41
      %s63 = sphi 0, %s65
      %s66 = sphi 0, %s63
      %s67 = sphi 0, %s66
      %s83 = sphi 0, %s67
      %s91 = sphi 0, %s93
      %s94 = sphi 0, %s91
      %s95 = sphi 0, %s94
      %s111 = sphi 0, %s95
      %s115 = sphi 0, %s115
      %s117 = sphi 0, %s115
      %s118 = sphi 0, %s117
      %s132 = sphi 0, %s118
      %s138 = sphi 0, %s140
      %s141 = sphi 0, %s138
      %s142 = sphi 0, %s141
      %s158 = sphi 0, %s142
    $region4: #{tpu_custom_call.1} parent=1 // loop_header_branch
      %16 = sbr.rel (%p14) target = $region8
    $region5: #{tpu_custom_call.1} parent=1 // loop_body
      %s18 = ssub.s32 %s13, 1
      %s19 = ssub.s32 %s13, 2
      %s26 = sadd.s32 1, %s21
      %p27 = scmp.ge.s32.totalorder %s26, 1
      %s28 = scalar_select %p27, 0, %s26
      %s29 = sadd.s32 1, %s20
      %s30 = scalar_select %p27, %s29, %s20
      %p31 = scmp.ge.s32.totalorder %s30, 2
      %s32 = scalar_select %p31, 0, %s30
      %s33 = ssub.s32 %s20, %s32
      %s34 = ssub.s32 %s21, %s28
      %s35 = sor.u32 %s33, %s34
      %p36 = scmp.eq.s32.totalorder %s35, 0
      %s38 = sadd.s32 %s37, 1
      %s39 = scalar_select %p36, %s37, %s38
      %p42 = pneg %p36
      %p43 = scmp.eq.s32.totalorder %s13, 1
      %p44 = por %p42, %p43
      %p45 = scmp.ne.s32.totalorder %s37, %s40
      %p46 = scmp.eq.s32.totalorder %s13, 0
      %p47 = por %p45, %p46
      %p48 = scmp.ne.s32.totalorder %s37, %s40
      %p49 = scmp.eq.s32.totalorder %s18, 1
      %p50 = por %p48, %p49
      %p51 = scmp.ne.s32.totalorder %s40, %s41
      %p52 = scmp.eq.s32.totalorder %s18, 0
      %p53 = por %p51, %p52
      %p54 = scmp.ne.s32.totalorder %s40, %s41
      %p55 = scmp.eq.s32.totalorder %s19, 1
      %p56 = por %p54, %p55
      %p58 = scmp.ne.s32.totalorder %s41, %s57
      %p59 = scmp.eq.s32.totalorder %s19, 0
      %p60 = por %p58, %p59
      %s61 = ssub.s32 %s20, %s32
      %p62 = scmp.eq.s32.totalorder %s61, 0
      %s64 = sadd.s32 %s63, 1
      %s65 = scalar_select %p62, %s63, %s64
      %p68 = pneg %p62
      %p69 = scmp.eq.s32.totalorder %s13, 1
      %p70 = por %p68, %p69
      %p71 = scmp.ne.s32.totalorder %s63, %s66
      %p72 = scmp.eq.s32.totalorder %s13, 0
      %p73 = por %p71, %p72
      %p74 = scmp.ne.s32.totalorder %s63, %s66
      %p75 = scmp.eq.s32.totalorder %s18, 1
      %p76 = por %p74, %p75
      %p77 = scmp.ne.s32.totalorder %s66, %s67
      %p78 = scmp.eq.s32.totalorder %s18, 0
      %p79 = por %p77, %p78
      %p80 = scmp.ne.s32.totalorder %s66, %s67
      %p81 = scmp.eq.s32.totalorder %s19, 1
      %p82 = por %p80, %p81
      %p84 = scmp.ne.s32.totalorder %s67, %s83
      %p85 = scmp.eq.s32.totalorder %s19, 0
      %p86 = por %p84, %p85
      %s87 = ssub.s32 %s20, %s32
      %s88 = ssub.s32 %s21, %s28
      %s89 = sor.u32 %s87, %s88
      %p90 = scmp.eq.s32.totalorder %s89, 0
      %s92 = sadd.s32 %s91, 1
      %s93 = scalar_select %p90, %s91, %s92
      %p96 = pneg %p90
      %p97 = scmp.eq.s32.totalorder %s13, 1
      %p98 = por %p96, %p97
      %p99 = scmp.ne.s32.totalorder %s91, %s94
      %p100 = scmp.eq.s32.totalorder %s13, 0
      %p101 = por %p99, %p100
      %p102 = scmp.ne.s32.totalorder %s91, %s94
      %p103 = scmp.eq.s32.totalorder %s18, 1
      %p104 = por %p102, %p103
      %p105 = scmp.ne.s32.totalorder %s94, %s95
      %p106 = scmp.eq.s32.totalorder %s18, 0
      %p107 = por %p105, %p106
      %p108 = scmp.ne.s32.totalorder %s94, %s95
      %p109 = scmp.eq.s32.totalorder %s19, 1
      %p110 = por %p108, %p109
      %p112 = scmp.ne.s32.totalorder %s95, %s111
      %p113 = scmp.eq.s32.totalorder %s19, 0
      %p114 = por %p112, %p113
      %s116 = sadd.s32 %s115, 1
      %p119 = scmp.eq.s32.totalorder %s13, 1
      %p120 = scmp.ne.s32.totalorder %s115, %s117
      %p121 = scmp.eq.s32.totalorder %s13, 0
      %p122 = por %p120, %p121
      %p123 = scmp.ne.s32.totalorder %s115, %s117
      %p124 = scmp.eq.s32.totalorder %s18, 1
      %p125 = por %p123, %p124
      %p126 = scmp.ne.s32.totalorder %s117, %s118
      %p127 = scmp.eq.s32.totalorder %s18, 0
      %p128 = por %p126, %p127
      %p129 = scmp.ne.s32.totalorder %s117, %s118
      %p130 = scmp.eq.s32.totalorder %s19, 1
      %p131 = por %p129, %p130
      %p133 = scmp.ne.s32.totalorder %s118, %s132
      %p134 = scmp.eq.s32.totalorder %s19, 0
      %p135 = por %p133, %p134
      %s136 = ssub.s32 %s20, %s32
      %p137 = scmp.eq.s32.totalorder %s136, 0
      %s139 = sadd.s32 %s138, 1
      %s140 = scalar_select %p137, %s138, %s139
      %p143 = pneg %p137
      %p144 = scmp.eq.s32.totalorder %s13, 1
      %p145 = por %p143, %p144
      %p146 = scmp.ne.s32.totalorder %s138, %s141
      %p147 = scmp.eq.s32.totalorder %s13, 0
      %p148 = por %p146, %p147
      %p149 = scmp.ne.s32.totalorder %s138, %s141
      %p150 = scmp.eq.s32.totalorder %s18, 1
      %p151 = por %p149, %p150
      %p152 = scmp.ne.s32.totalorder %s141, %s142
      %p153 = scmp.eq.s32.totalorder %s18, 0
      %p154 = por %p152, %p153
      %p155 = scmp.ne.s32.totalorder %s141, %s142
      %p156 = scmp.eq.s32.totalorder %s19, 1
      %p157 = por %p155, %p156
      %p159 = scmp.ne.s32.totalorder %s142, %s158
      %p160 = scmp.eq.s32.totalorder %s19, 0
      %p161 = por %p159, %p160
      %p162 = scmp.le.s32.totalorder 1, %s13
      %p163 = scmp.lt.s32.totalorder %s13, 3
      %p164 = pnand %p162, %p163
      %p165 = pneg %p164
      // Predicated region
      $region9: #{tpu_custom_call.1} parent=5 // pred_check
        _
      $region10: #{tpu_custom_call.1} parent=5 // pred_check_branch
        %167 = sbr.rel (%p164) target = $region12
      $region11: #{tpu_custom_call.1} parent=5 // pred_region
        %s168 = ssub.s32 %s13, 1
        // Predicated region
        $region13: #{tpu_custom_call.1} parent=11 // pred_check
          %p169 = pneg %p128
        $region14: #{tpu_custom_call.1} parent=11 // pred_check_branch
          %171 = sbr.rel (%p169) target = $region16
        $region15: #{tpu_custom_call.1} parent=11 // pred_region
          _
        $region16: #{tpu_custom_call.1} parent=11 // pred_fallthru
          _
      $region12: #{tpu_custom_call.1} parent=5 // pred_fallthru
        _
      %p172 = scmp.lt.s32.totalorder %s13, 2
      // Predicated region
      $region17: #{tpu_custom_call.1} parent=5 // pred_check
        %p173 = pneg %p172
      $region18: #{tpu_custom_call.1} parent=5 // pred_check_branch
        %175 = sbr.rel (%p173) target = $region20
      $region19: #{tpu_custom_call.1} parent=5 // pred_region
        // Predicated region
        $region21: #{tpu_custom_call.1} parent=19 // pred_check
          %p176 = pneg %p47
        $region22: #{tpu_custom_call.1} parent=19 // pred_check_branch
          %178 = sbr.rel (%p176) target = $region24
        $region23: #{tpu_custom_call.1} parent=19 // pred_region
          %s179 = smul.u32 2, %s21
          %p180 = scmp.lt.s32.totalorder %s20, 1
          %s181 = scalar_select %p180, %s20, 1
          %p182 = scmp.lt.s32.totalorder %s179, 1
          %s183 = scalar_select %p182, %s179, 1
          %s184 = smul.addr %s181, 2
          %s185 = sadd.s32 %s183, %s184
          %s186 = smul.addr %s185, 8
          %s187 = scalar_lea.vmem %s0, %s186
          %s188 = smul.u32 2, %s21
        $region24: #{tpu_custom_call.1} parent=19 // pred_fallthru
          _
        // Predicated region
        $region25: #{tpu_custom_call.1} parent=19 // pred_check
          %p189 = pneg %p73
        $region26: #{tpu_custom_call.1} parent=19 // pred_check_branch
          %191 = sbr.rel (%p189) target = $region28
        $region27: #{tpu_custom_call.1} parent=19 // pred_region
          %p192 = scmp.lt.s32.totalorder %s20, 1
          %s193 = scalar_select %p192, %s20, 1
          %s194 = scalar_lea.vmem %s1, %s193
        $region28: #{tpu_custom_call.1} parent=19 // pred_fallthru
          _
        // Predicated region
        $region29: #{tpu_custom_call.1} parent=19 // pred_check
          %p195 = pneg %p101
        $region30: #{tpu_custom_call.1} parent=19 // pred_check_branch
          %197 = sbr.rel (%p195) target = $region32
        $region31: #{tpu_custom_call.1} parent=19 // pred_region
          %s198 = smul.u32 2, %s21
          %p199 = scmp.lt.s32.totalorder %s20, 1
          %s200 = scalar_select %p199, %s20, 1
          %p201 = scmp.lt.s32.totalorder %s198, 1
          %s202 = scalar_select %p201, %s198, 1
          %s203 = smul.addr %s200, 2
          %s204 = sadd.s32 %s202, %s203
          %s205 = smul.addr %s204, 8
          %s206 = scalar_lea.vmem %s2, %s205
          %s207 = smul.u32 2, %s21
        $region32: #{tpu_custom_call.1} parent=19 // pred_fallthru
          _
      $region20: #{tpu_custom_call.1} parent=5 // pred_fallthru
        _
      %p208 = scmp.le.s32.totalorder 1, %s13
      %p209 = scmp.lt.s32.totalorder %s13, 3
      %p210 = pnand %p208, %p209
      %p211 = pneg %p210
      // Predicated region
      $region33: #{tpu_custom_call.1} parent=5 // pred_check
        _
      $region34: #{tpu_custom_call.1} parent=5 // pred_check_branch
        %213 = sbr.rel (%p210) target = $region36
      $region35: #{tpu_custom_call.1} parent=5 // pred_region
        %s214 = ssub.s32 %s13, 1
        %s215 = smul.u32 2, %s23
        %p216 = scmp.lt.s32.totalorder %s22, 1
        %s217 = scalar_select %p216, %s22, 1
        %p218 = scmp.lt.s32.totalorder %s215, 1
        %s219 = scalar_select %p218, %s215, 1
        %s220 = smul.addr %s217, 2
        %s221 = sadd.s32 %s219, %s220
        %s222 = smul.addr %s221, 8
        %s223 = scalar_lea.vmem %s0, %s222
        %p224 = pneg %p53
        %p225 = pneg %p50
        %p226 = scmp.lt.s32.totalorder %s22, 1
        %s227 = scalar_select %p226, %s22, 1
        %s228 = scalar_lea.vmem %s1, %s227
        %p229 = pneg %p79
        %p230 = pneg %p76
        %s231 = smul.u32 2, %s23
        %p232 = scmp.lt.s32.totalorder %s22, 1
        %s233 = scalar_select %p232, %s22, 1
        %p234 = scmp.lt.s32.totalorder %s231, 1
        %s235 = scalar_select %p234, %s231, 1
        %s236 = smul.addr %s233, 2
        %s237 = sadd.s32 %s235, %s236
        %s238 = smul.addr %s237, 8
        %s239 = scalar_lea.vmem %s2, %s238
        %p240 = pneg %p107
        %p241 = pneg %p104
        %p242 = pneg %p128
        %p243 = pneg %p125
        %p244 = pneg %p154
        %p245 = pneg %p151
        %s246 = sand.u32 %s141, 1
        %s247 = scalar_lea.sflag [#allocation3], %s246
        %s248 = sand.u32 %s141, 1
        %s249 = smul.addr %s248, 8
        %s250 = scalar_lea.vmem [#allocation2], %s249
        %s251 = smul.u32 2, %s23
        %p252 = scmp.lt.s32.totalorder %s22, 1
        %s253 = scalar_select %p252, %s22, 1
        %p254 = scmp.lt.s32.totalorder %s251, 1
        %s255 = scalar_select %p254, %s251, 1
        %s256 = smul.addr %s253, 2
        %s257 = sadd.s32 %s255, %s256
        %s258 = smul.addr %s257, 8
        %s259 = scalar_lea.vmem %s0, %s258
        %s260 = smul.u32 2, %s23
        %p261 = scmp.lt.s32.totalorder %s22, 1
        %s262 = scalar_select %p261, %s22, 1
        %s263 = scalar_lea.vmem %s1, %s262
        %s264 = smul.u32 2, %s23
        %p265 = scmp.lt.s32.totalorder %s22, 1
        %s266 = scalar_select %p265, %s22, 1
        %p267 = scmp.lt.s32.totalorder %s264, 1
        %s268 = scalar_select %p267, %s264, 1
        %s269 = smul.addr %s266, 2
        %s270 = sadd.s32 %s268, %s269
        %s271 = smul.addr %s270, 8
        %s272 = scalar_lea.vmem %s2, %s271
        %s273 = smul.u32 2, %s23
        %p274 = scmp.eq.s32.totalorder %s23, 0
        // Predicated region
        $region37: #{tpu_custom_call.1} parent=35 // pred_check
          %p275 = pneg %p274
        $region38: #{tpu_custom_call.1} parent=35 // pred_check_branch
          %277 = sbr.rel (%p275) target = $region40
        $region39: #{tpu_custom_call.1} parent=35 // pred_region
          %vm278 = vcmask 261120
          %279 = vst.msk [vmem:[%s250] sm:$0xff] %vm278, 0.0
        $region40: #{tpu_custom_call.1} parent=35 // pred_fallthru
          _
        %v280 = vld [vmem:[%s259] sm:$0xff]
        %v281 = vld [vmem:[%s259 + $0x8] sm:$0xff]
        %v282 = vld [vmem:[%s263] sm:$0x1]
        %v283 = vld [vmem:[%s272] sm:$0xff]
        %v284 = vld [vmem:[%s272 + $0x8] sm:$0xff]
        %v285 = vld [vmem:[%s3] sm:$0x1]
        %v287 = vlaneseq
        %v288 = vshrl.u32 %v287, 7
        %v289 = vsub.s32 0, %v288
        %v290 = vrot.slane %v282, %v289
        %293 = vset.pattern.permute.xlu0 0
        %294 = vperm.xlu0 %293, %v280
        %v295 = vpop.permute.xlu0 %294
        %298 = vset.pattern.permute.xlu0 0
        %299 = vperm.xlu0 %298, %v281
        %v300 = vpop.permute.xlu0 %299
        %v302 = vsub.f32 %v290, %v295
        %v303 = vsub.f32 %v290, %v300
        %v304 = vmul.f32 %v302, %v302
        %v305 = vmul.f32 %v303, %v303
        %v306 = vlaneseq
        %v307 = vshrl.u32 %v306, 7
        %v308 = vsub.s32 0, %v307
        %v309 = vrot.slane %v304, %v308
        %311 = vbcast.lane.b32.xlu0 %v309, 256
        %v312 = vpop.permute.xlu0 %311
        %v313 = vlaneseq
        %v314 = vshrl.u32 %v313, 7
        %v315 = vsub.s32 1, %v314
        %v316 = vrot.slane %v304, %v315
        %318 = vbcast.lane.b32.xlu0 %v316, 256
        %v319 = vpop.permute.xlu0 %318
        %v320 = vlaneseq
        %v321 = vshrl.u32 %v320, 7
        %v322 = vsub.s32 2, %v321
        %v323 = vrot.slane %v304, %v322
        %325 = vbcast.lane.b32.xlu0 %v323, 256
        %v326 = vpop.permute.xlu0 %325
        %v327 = vlaneseq
        %v328 = vshrl.u32 %v327, 7
        %v329 = vsub.s32 3, %v328
        %v330 = vrot.slane %v304, %v329
        %332 = vbcast.lane.b32.xlu0 %v330, 256
        %v333 = vpop.permute.xlu0 %332
        %v334 = vlaneseq
        %v335 = vshrl.u32 %v334, 7
        %v336 = vsub.s32 4, %v335
        %v337 = vrot.slane %v304, %v336
        %339 = vbcast.lane.b32.xlu0 %v337, 256
        %v340 = vpop.permute.xlu0 %339
        %v341 = vlaneseq
        %v342 = vshrl.u32 %v341, 7
        %v343 = vsub.s32 5, %v342
        %v344 = vrot.slane %v304, %v343
        %346 = vbcast.lane.b32.xlu0 %v344, 256
        %v347 = vpop.permute.xlu0 %346
        %v348 = vlaneseq
        %v349 = vshrl.u32 %v348, 7
        %v350 = vsub.s32 6, %v349
        %v351 = vrot.slane %v304, %v350
        %353 = vbcast.lane.b32.xlu0 %v351, 256
        %v354 = vpop.permute.xlu0 %353
        %v355 = vlaneseq
        %v356 = vshrl.u32 %v355, 7
        %v357 = vsub.s32 7, %v356
        %v358 = vrot.slane %v304, %v357
        %360 = vbcast.lane.b32.xlu0 %v358, 256
        %v361 = vpop.permute.xlu0 %360
        %v362 = vlaneseq
        %v363 = vshrl.u32 %v362, 7
        %v364 = vsub.s32 0, %v363
        %v365 = vrot.slane %v305, %v364
        %367 = vbcast.lane.b32.xlu0 %v365, 256
        %v368 = vpop.permute.xlu0 %367
        %v369 = vlaneseq
        %v370 = vshrl.u32 %v369, 7
        %v371 = vsub.s32 1, %v370
        %v372 = vrot.slane %v305, %v371
        %374 = vbcast.lane.b32.xlu0 %v372, 256
        %v375 = vpop.permute.xlu0 %374
        %v376 = vlaneseq
        %v377 = vshrl.u32 %v376, 7
        %v378 = vsub.s32 2, %v377
        %v379 = vrot.slane %v305, %v378
        %381 = vbcast.lane.b32.xlu0 %v379, 256
        %v382 = vpop.permute.xlu0 %381
        %v383 = vlaneseq
        %v384 = vshrl.u32 %v383, 7
        %v385 = vsub.s32 3, %v384
        %v386 = vrot.slane %v305, %v385
        %388 = vbcast.lane.b32.xlu0 %v386, 256
        %v389 = vpop.permute.xlu0 %388
        %v390 = vlaneseq
        %v391 = vshrl.u32 %v390, 7
        %v392 = vsub.s32 4, %v391
        %v393 = vrot.slane %v305, %v392
        %395 = vbcast.lane.b32.xlu0 %v393, 256
        %v396 = vpop.permute.xlu0 %395
        %v397 = vlaneseq
        %v398 = vshrl.u32 %v397, 7
        %v399 = vsub.s32 5, %v398
        %v400 = vrot.slane %v305, %v399
        %402 = vbcast.lane.b32.xlu0 %v400, 256
        %v403 = vpop.permute.xlu0 %402
        %v404 = vlaneseq
        %v405 = vshrl.u32 %v404, 7
        %v406 = vsub.s32 6, %v405
        %v407 = vrot.slane %v305, %v406
        %409 = vbcast.lane.b32.xlu0 %v407, 256
        %v410 = vpop.permute.xlu0 %409
        %v411 = vlaneseq
        %v412 = vshrl.u32 %v411, 7
        %v413 = vsub.s32 7, %v412
        %v414 = vrot.slane %v305, %v413
        %416 = vbcast.lane.b32.xlu0 %v414, 256
        %v417 = vpop.permute.xlu0 %416
        %v419 = vlaneseq
        %v420 = vshrl.u32 %v419, 7
        %v421 = vsub.s32 0, %v420
        %v422 = vrot.slane %v285, %v421
        %v424 = vmul.f32 %v312, %v422
        %v425 = vmul.f32 %v319, %v422
        %v426 = vmul.f32 %v326, %v422
        %v427 = vmul.f32 %v333, %v422
        %v428 = vmul.f32 %v340, %v422
        %v429 = vmul.f32 %v347, %v422
        %v430 = vmul.f32 %v354, %v422
        %v431 = vmul.f32 %v361, %v422
        %v432 = vmul.f32 %v368, %v422
        %v433 = vmul.f32 %v375, %v422
        %v434 = vmul.f32 %v382, %v422
        %v435 = vmul.f32 %v389, %v422
        %v436 = vmul.f32 %v396, %v422
        %v437 = vmul.f32 %v403, %v422
        %v438 = vmul.f32 %v410, %v422
        %v439 = vmul.f32 %v417, %v422
        %v440 = vmul.f32 %v424, 1.442695
        %v441 = vpow.pop %v440
        %v442 = vmul.f32 %v425, 1.442695
        %v443 = vpow.pop %v442
        %v444 = vmul.f32 %v426, 1.442695
        %v445 = vpow.pop %v444
        %v446 = vmul.f32 %v427, 1.442695
        %v447 = vpow.pop %v446
        %v448 = vmul.f32 %v428, 1.442695
        %v449 = vpow.pop %v448
        %v450 = vmul.f32 %v429, 1.442695
        %v451 = vpow.pop %v450
        %v452 = vmul.f32 %v430, 1.442695
        %v453 = vpow.pop %v452
        %v454 = vmul.f32 %v431, 1.442695
        %v455 = vpow.pop %v454
        %v456 = vmul.f32 %v432, 1.442695
        %v457 = vpow.pop %v456
        %v458 = vmul.f32 %v433, 1.442695
        %v459 = vpow.pop %v458
        %v460 = vmul.f32 %v434, 1.442695
        %v461 = vpow.pop %v460
        %v462 = vmul.f32 %v435, 1.442695
        %v463 = vpow.pop %v462
        %v464 = vmul.f32 %v436, 1.442695
        %v465 = vpow.pop %v464
        %v466 = vmul.f32 %v437, 1.442695
        %v467 = vpow.pop %v466
        %v468 = vmul.f32 %v438, 1.442695
        %v469 = vpow.pop %v468
        %v470 = vmul.f32 %v439, 1.442695
        %v471 = vpow.pop %v470
        %v472 = vld [vmem:[%s250] sm:$0xff]
        %v475 = vcombine.high %v283, %v283
        %v477 = vunpack.c.l.s4 1966171168
        %v478 = vunpack.c.0.s8 %v477
        %v479 = vlaneseq
        %v480 = vshrl.u32 %v479, 7
        %v481 = vsub.s32 %v478, %v480
        %v482 = vrot.slane %v283, %v481
        %v484 = vunpack.c.l.s4 1966171168
        %v485 = vunpack.c.0.s8 %v484
        %v486 = vlaneseq
        %v487 = vshrl.u32 %v486, 7
        %v488 = vsub.s32 %v485, %v487
        %v489 = vrot.slane %v475, %v488
        %v490 = vcombine.high %v482, %v482
        %v491 = vcombine.high %v489, %v489
        %v493 = vunpack.c.l.s4 1966171168
        %v494 = vunpack.c.0.s8 %v493
        %v495 = vlaneseq
        %v496 = vshrl.u32 %v495, 7
        %v497 = vsub.s32 %v494, %v496
        %v498 = vrot.slane %v482, %v497
        %v500 = vunpack.c.l.s4 1966171168
        %v501 = vunpack.c.0.s8 %v500
        %v502 = vlaneseq
        %v503 = vshrl.u32 %v502, 7
        %v504 = vsub.s32 %v501, %v503
        %v505 = vrot.slane %v489, %v504
        %v507 = vunpack.c.l.s4 1966171168
        %v508 = vunpack.c.0.s8 %v507
        %v509 = vlaneseq
        %v510 = vshrl.u32 %v509, 7
        %v511 = vsub.s32 %v508, %v510
        %v512 = vrot.slane %v490, %v511
        %v514 = vunpack.c.l.s4 1966171168
        %v515 = vunpack.c.0.s8 %v514
        %v516 = vlaneseq
        %v517 = vshrl.u32 %v516, 7
        %v518 = vsub.s32 %v515, %v517
        %v519 = vrot.slane %v491, %v518
        %v520 = vcombine.high %v498, %v498
        %v521 = vcombine.high %v505, %v505
        %v522 = vcombine.high %v512, %v512
        %v523 = vcombine.high %v519, %v519
        %v524 = vcombine.high %v284, %v284
        %v526 = vunpack.c.l.s4 1966171168
        %v527 = vunpack.c.0.s8 %v526
        %v528 = vlaneseq
        %v529 = vshrl.u32 %v528, 7
        %v530 = vsub.s32 %v527, %v529
        %v531 = vrot.slane %v284, %v530
        %v533 = vunpack.c.l.s4 1966171168
        %v534 = vunpack.c.0.s8 %v533
        %v535 = vlaneseq
        %v536 = vshrl.u32 %v535, 7
        %v537 = vsub.s32 %v534, %v536
        %v538 = vrot.slane %v524, %v537
        %v539 = vcombine.high %v531, %v531
        %v540 = vcombine.high %v538, %v538
        %v542 = vunpack.c.l.s4 1966171168
        %v543 = vunpack.c.0.s8 %v542
        %v544 = vlaneseq
        %v545 = vshrl.u32 %v544, 7
        %v546 = vsub.s32 %v543, %v545
        %v547 = vrot.slane %v531, %v546
        %v549 = vunpack.c.l.s4 1966171168
        %v550 = vunpack.c.0.s8 %v549
        %v551 = vlaneseq
        %v552 = vshrl.u32 %v551, 7
        %v553 = vsub.s32 %v550, %v552
        %v554 = vrot.slane %v538, %v553
        %v556 = vunpack.c.l.s4 1966171168
        %v557 = vunpack.c.0.s8 %v556
        %v558 = vlaneseq
        %v559 = vshrl.u32 %v558, 7
        %v560 = vsub.s32 %v557, %v559
        %v561 = vrot.slane %v539, %v560
        %v563 = vunpack.c.l.s4 1966171168
        %v564 = vunpack.c.0.s8 %v563
        %v565 = vlaneseq
        %v566 = vshrl.u32 %v565, 7
        %v567 = vsub.s32 %v564, %v566
        %v568 = vrot.slane %v540, %v567
        %v569 = vcombine.high %v547, %v547
        %v570 = vcombine.high %v554, %v554
        %v571 = vcombine.high %v561, %v561
        %v572 = vcombine.high %v568, %v568
        %v573 = vlaneseq
        %v574 = vshrl.u32 %v573, 7
        %v575 = vsub.s32 0, %v574
        %v576 = vrot.slane %v498, %v575
        %v577 = vlaneseq
        %v578 = vshrl.u32 %v577, 7
        %v579 = vsub.s32 0, %v578
        %v580 = vrot.slane %v512, %v579
        %v581 = vlaneseq
        %v582 = vshrl.u32 %v581, 7
        %v583 = vsub.s32 0, %v582
        %v584 = vrot.slane %v520, %v583
        %v585 = vlaneseq
        %v586 = vshrl.u32 %v585, 7
        %v587 = vsub.s32 0, %v586
        %v588 = vrot.slane %v522, %v587
        %v589 = vlaneseq
        %v590 = vshrl.u32 %v589, 7
        %v591 = vsub.s32 0, %v590
        %v592 = vrot.slane %v505, %v591
        %v593 = vlaneseq
        %v594 = vshrl.u32 %v593, 7
        %v595 = vsub.s32 0, %v594
        %v596 = vrot.slane %v519, %v595
        %v597 = vlaneseq
        %v598 = vshrl.u32 %v597, 7
        %v599 = vsub.s32 0, %v598
        %v600 = vrot.slane %v521, %v599
        %v601 = vlaneseq
        %v602 = vshrl.u32 %v601, 7
        %v603 = vsub.s32 0, %v602
        %v604 = vrot.slane %v523, %v603
        %v605 = vlaneseq
        %v606 = vshrl.u32 %v605, 7
        %v607 = vsub.s32 0, %v606
        %v608 = vrot.slane %v547, %v607
        %v609 = vlaneseq
        %v610 = vshrl.u32 %v609, 7
        %v611 = vsub.s32 0, %v610
        %v612 = vrot.slane %v561, %v611
        %v613 = vlaneseq
        %v614 = vshrl.u32 %v613, 7
        %v615 = vsub.s32 0, %v614
        %v616 = vrot.slane %v569, %v615
        %v617 = vlaneseq
        %v618 = vshrl.u32 %v617, 7
        %v619 = vsub.s32 0, %v618
        %v620 = vrot.slane %v571, %v619
        %v621 = vlaneseq
        %v622 = vshrl.u32 %v621, 7
        %v623 = vsub.s32 0, %v622
        %v624 = vrot.slane %v554, %v623
        %v625 = vlaneseq
        %v626 = vshrl.u32 %v625, 7
        %v627 = vsub.s32 0, %v626
        %v628 = vrot.slane %v568, %v627
        %v629 = vlaneseq
        %v630 = vshrl.u32 %v629, 7
        %v631 = vsub.s32 0, %v630
        %v632 = vrot.slane %v570, %v631
        %v633 = vlaneseq
        %v634 = vshrl.u32 %v633, 7
        %v635 = vsub.s32 0, %v634
        %v636 = vrot.slane %v572, %v635
        %v653 = vmul.f32 %v576, %v441
        %v654 = vmul.f32 %v580, %v443
        %v655 = vmul.f32 %v584, %v445
        %v656 = vmul.f32 %v588, %v447
        %v657 = vmul.f32 %v592, %v449
        %v658 = vmul.f32 %v596, %v451
        %v659 = vmul.f32 %v600, %v453
        %v660 = vmul.f32 %v604, %v455
        %v661 = vmul.f32 %v608, %v457
        %v662 = vmul.f32 %v612, %v459
        %v663 = vmul.f32 %v616, %v461
        %v664 = vmul.f32 %v620, %v463
        %v665 = vmul.f32 %v624, %v465
        %v666 = vmul.f32 %v628, %v467
        %v667 = vmul.f32 %v632, %v469
        %v668 = vmul.f32 %v636, %v471
        %vm669 = vcmask 261120
        %v670 = vsel %vm669, %v653, 0.0
        %v671 = vsel %vm669, %v654, 0.0
        %v672 = vadd.f32 %v670, %v671
        %v673 = vsel %vm669, %v655, 0.0
        %v674 = vadd.f32 %v672, %v673
        %v675 = vsel %vm669, %v656, 0.0
        %v676 = vadd.f32 %v674, %v675
        %v677 = vsel %vm669, %v657, 0.0
        %v678 = vadd.f32 %v676, %v677
        %v679 = vsel %vm669, %v658, 0.0
        %v680 = vadd.f32 %v678, %v679
        %v681 = vsel %vm669, %v659, 0.0
        %v682 = vadd.f32 %v680, %v681
        %v683 = vsel %vm669, %v660, 0.0
        %v684 = vadd.f32 %v682, %v683
        %v685 = vsel %vm669, %v661, 0.0
        %v686 = vadd.f32 %v684, %v685
        %v687 = vsel %vm669, %v662, 0.0
        %v688 = vadd.f32 %v686, %v687
        %v689 = vsel %vm669, %v663, 0.0
        %v690 = vadd.f32 %v688, %v689
        %v691 = vsel %vm669, %v664, 0.0
        %v692 = vadd.f32 %v690, %v691
        %v693 = vsel %vm669, %v665, 0.0
        %v694 = vadd.f32 %v692, %v693
        %v695 = vsel %vm669, %v666, 0.0
        %v696 = vadd.f32 %v694, %v695
        %v697 = vsel %vm669, %v667, 0.0
        %v698 = vadd.f32 %v696, %v697
        %v699 = vsel %vm669, %v668, 0.0
        %v700 = vadd.f32 %v698, %v699
        %v701 = vadd.f32 %v472, %v700
        %702 = vst.msk [vmem:[%s250] sm:$0xff] %vm669, %v701
        %s703 = sand.u32 %s141, 1
        %s704 = scalar_lea.sflag [#allocation3], %s703
        %s705 = sand.u32 %s141, 1
        %s706 = smul.addr %s705, 8
        %s707 = scalar_lea.vmem [#allocation2], %s706
        // Predicated region
        $region41: #{tpu_custom_call.1} parent=35 // pred_check
          %p708 = pneg %p151
        $region42: #{tpu_custom_call.1} parent=35 // pred_check_branch
          %710 = sbr.rel (%p708) target = $region44
        $region43: #{tpu_custom_call.1} parent=35 // pred_region
          %s712 = ssub.s32 128, 128
          %713 = vsyncadd %s704, %s712
          %s714 = smul.addr %s22, 128
          %s715 = scalar_lea.hbm %s4, %s714
          %s717 = sshll.u32 %s707, 4
          %s718 = int_to_ptr.vmem [resolvable:$true] %s717
          %720 = dma.vmem_to_hbm [thread:$0]  %s718, 128, %s715, %s704
        $region44: #{tpu_custom_call.1} parent=35 // pred_fallthru
          _
      $region36: #{tpu_custom_call.1} parent=5 // pred_fallthru
        _
      %p721 = scmp.le.s32.totalorder 2, %s13
      // Predicated region
      $region45: #{tpu_custom_call.1} parent=5 // pred_check
        %p722 = pneg %p721
      $region46: #{tpu_custom_call.1} parent=5 // pred_check_branch
        %724 = sbr.rel (%p722) target = $region48
      $region47: #{tpu_custom_call.1} parent=5 // pred_region
        %s725 = ssub.s32 %s13, 2
        // Predicated region
        $region49: #{tpu_custom_call.1} parent=47 // pred_check
          %p726 = pneg %p157
        $region50: #{tpu_custom_call.1} parent=47 // pred_check_branch
          %728 = sbr.rel (%p726) target = $region52
        $region51: #{tpu_custom_call.1} parent=47 // pred_region
          %s729 = sand.u32 %s142, 1
          %s730 = scalar_lea.sflag [#allocation3], %s729
          %s731 = sand.u32 %s142, 1
          %s732 = smul.addr %s731, 8
          %s733 = scalar_lea.vmem [#allocation2], %s732
          %734 = dma.done %s730, 128
        $region52: #{tpu_custom_call.1} parent=47 // pred_fallthru
          _
      $region48: #{tpu_custom_call.1} parent=5 // pred_fallthru
        _
    $region6: #{tpu_custom_call.1} parent=1 // loop_footer
      %s17 = sadd.s32 1, %s13
    $region7: #{tpu_custom_call.1} parent=1 // loop_footer_branch
      %12 = sbr.rel target = $region3
    $region8: #{tpu_custom_call.1} parent=1 // loop_exit
      _
    %735 = vsyncpa [#allocation3], 1
    %s736 = scalar_lea.sflag [#allocation3], 1
    %737 = vsyncpa %s736, 1

</llo_original>
